<compile_context>
chip_gen: v5e
topology: v5e:2x2
jax: 0.10.0
libtpu: 0.0.40
codegen_flags: <defaults>
</compile_context>

<pallas_src>
import functools

import jax
import jax.numpy as jnp
from jax.experimental import pallas as pl
from jax.experimental.pallas import tpu as pltpu

LAMBDA_PARAM = 25.0
MU_PARAM = 25.0
NU_PARAM = 1.0
EPS = 1e-4


def _round_up(x, m):
    return ((x + m - 1) // m) * m


def _make_vicreg_kernel(true_b, true_d):
    """Kernel closure over the *true* (unpadded) batch and feature sizes."""

    def kernel(za_ref, zb_ref, out_ref,
               gram_a, gram_b, sum_a, sum_b, sq_a, sq_b, dsq):
        k = pl.program_id(0)
        dims = (((0,), (0,)), ((), ()))  # contract over the batch axis

        @pl.when(k == 0)
        def _init():
            gram_a[...] = jnp.zeros_like(gram_a)
            gram_b[...] = jnp.zeros_like(gram_b)
            sum_a[...] = jnp.zeros_like(sum_a)
            sum_b[...] = jnp.zeros_like(sum_b)
            sq_a[...] = jnp.zeros_like(sq_a)
            sq_b[...] = jnp.zeros_like(sq_b)
            dsq[...] = jnp.zeros_like(dsq)

        # Raw (uncentered) Gram accumulation on the MXU. Operands stay in the
        # input dtype (bf16 stays bf16); accumulation is f32.
        za = za_ref[...]
        zb = zb_ref[...]
        gram_a[...] += jax.lax.dot_general(
            za, za, dims, preferred_element_type=jnp.float32)
        gram_b[...] += jax.lax.dot_general(
            zb, zb, dims, preferred_element_type=jnp.float32)

        # Column statistics + invariance partial sums (f32 elementwise path).
        za32 = za.astype(jnp.float32)
        zb32 = zb.astype(jnp.float32)
        sum_a[...] += jnp.sum(za32, axis=0, keepdims=True)
        sum_b[...] += jnp.sum(zb32, axis=0, keepdims=True)
        sq_a[...] += jnp.sum(za32 * za32, axis=0, keepdims=True)
        sq_b[...] += jnp.sum(zb32 * zb32, axis=0, keepdims=True)
        diff = za32 - zb32
        dsq[...] += jnp.sum(diff * diff, axis=0, keepdims=True)

        @pl.when(k == pl.num_programs(0) - 1)
        def _finalize():
            b = float(true_b)
            d = float(true_d)
            inv_b = 1.0 / b
            bm1 = b - 1.0

            # invariance: F.mse_loss = sum(diff^2) / (B * D)
            inv_loss = jnp.sum(dsq[...]) * (1.0 / (b * d))

            def per_input(gram_ref, s_ref, ss_ref):
                s = s_ref[...]                         # (1, D)  Σx
                # diag of centered Gram: Σ(x-μ)^2 per column
                diag = ss_ref[...] - s * s * inv_b     # (1, D)
                # variance loss: mean(relu(1 - sqrt(var_unbiased + eps)))
                std = jnp.sqrt(diag * (1.0 / bm1) + EPS)
                vloss = jnp.sum(jnp.maximum(0.0, 1.0 - std)) * (1.0 / d)
                # centered Gram = cov * (B - 1), via rank-1 mean correction
                outer = jax.lax.dot_general(
                    s, s, dims, preferred_element_type=jnp.float32)  # (D, D)
                c = gram_ref[...] - outer * inv_b
                # off-diagonal squared sum = total - diagonal; fold 1/(B-1)^2
                # and 1/D into the final scalar instead of scaling the matrix.
                covloss = (jnp.sum(c * c) - jnp.sum(diag * diag)) * (
                    1.0 / (bm1 * bm1 * d))
                return vloss, covloss

            v_a, c_a = per_input(gram_a, sum_a, sq_a)
            v_b, c_b = per_input(gram_b, sum_b, sq_b)

            out_ref[0] = (LAMBDA_PARAM * inv_loss
                          + MU_PARAM * 0.5 * (v_a + v_b)
                          + NU_PARAM * (c_a + c_b))

    return kernel


@functools.partial(jax.jit, static_argnames=("block_rows",))
def vicreg_loss(z_a, z_b, block_rows=256):
    assert z_a.shape == z_b.shape, "z_a and z_b must have the same shape"
    assert z_a.ndim == 2, "only the (batch, dim) case is supported"
    B, D = z_a.shape
    assert B > 1, "batch size must be > 1"

    # Row tile: multiple of 8 sublanes, capped by block_rows.
    tb = min(block_rows, _round_up(B, 8))
    tb = _round_up(tb, 8)
    Bp = _round_up(B, tb)
    if Bp != B:
        pad = Bp - B
        # Zero rows contribute nothing to any accumulator.
        z_a = jnp.pad(z_a, ((0, pad), (0, 0)))
        z_b = jnp.pad(z_b, ((0, pad), (0, 0)))
    num_tiles = Bp // tb

    itemsize = jnp.dtype(z_a.dtype).itemsize
    d_lanes = _round_up(D, 128)
    vmem_bytes = (2 * 2 * tb * d_lanes * itemsize     # double-buffered input tiles
                  + 2 * D * d_lanes * 4               # Gram accumulators
                  + 5 * 8 * d_lanes * 4)              # column accumulators
    vmem_limit = int(min(128 * 1024 * 1024,
                         max(2 * vmem_bytes, 16 * 1024 * 1024)))

    cost = pl.CostEstimate(
        flops=int(4 * Bp * D * D + 12 * Bp * D),
        transcendentals=int(2 * D),
        bytes_accessed=int(2 * Bp * D * itemsize + 4),
    )

    grid_spec = pltpu.PrefetchScalarGridSpec(
        num_scalar_prefetch=0,
        grid=(num_tiles,),
        in_specs=[
            pl.BlockSpec((tb, D), lambda k: (k, 0)),
            pl.BlockSpec((tb, D), lambda k: (k, 0)),
        ],
        out_specs=pl.BlockSpec(memory_space=pltpu.MemorySpace.SMEM),
        scratch_shapes=[
            pltpu.VMEM((D, D), jnp.float32),   # gram_a
            pltpu.VMEM((D, D), jnp.float32),   # gram_b
            pltpu.VMEM((1, D), jnp.float32),   # sum_a
            pltpu.VMEM((1, D), jnp.float32),   # sum_b
            pltpu.VMEM((1, D), jnp.float32),   # sq_a
            pltpu.VMEM((1, D), jnp.float32),   # sq_b
            pltpu.VMEM((1, D), jnp.float32),   # dsq
        ],
    )

    out = pl.pallas_call(
        _make_vicreg_kernel(B, D),
        out_shape=jax.ShapeDtypeStruct((1,), jnp.float32),
        grid_spec=grid_spec,
        compiler_params=pltpu.CompilerParams(
            dimension_semantics=("arbitrary",),
            vmem_limit_bytes=vmem_limit,
        ),
        cost_estimate=cost,
    )(z_a, z_b)
    return out[0]


def _vicreg_loss_ref(z_a, z_b):
    """Plain-JAX reference mirroring the PyTorch module (2-D inputs)."""
    z_a = z_a.astype(jnp.float32)
    z_b = z_b.astype(jnp.float32)
    B, D = z_a.shape
    inv = jnp.mean((z_a - z_b) ** 2)

    def var_l(x):
        v = jnp.var(x, axis=0, ddof=1)
        return jnp.mean(jnp.maximum(0.0, 1.0 - jnp.sqrt(v + EPS)))

    var = 0.5 * (var_l(z_a) + var_l(z_b))

    def cov_l(x):
        xc = x - jnp.mean(x, axis=0, keepdims=True)
        cov = (xc.T @ xc) / (B - 1)
        mask = 1.0 - jnp.eye(D, dtype=jnp.float32)
        return jnp.sum((cov ** 2) * mask) / D

    cov = cov_l(z_a) + cov_l(z_b)
    return LAMBDA_PARAM * inv + MU_PARAM * var + NU_PARAM * cov


if __name__ == "__main__":
    key = jax.random.PRNGKey(0)
    k1, k2, k3, k4 = jax.random.split(key, 4)

    # Case 1: small aligned shape (single grid step).
    za = jax.random.normal(k1, (8, 32), dtype=jnp.float32)
    zb = jax.random.normal(k2, (8, 32), dtype=jnp.float32)
    loss = vicreg_loss(za, zb)
    jax.block_until_ready(loss)
    ref = _vicreg_loss_ref(za, zb)
    assert jnp.allclose(loss, ref, rtol=1e-4, atol=1e-4), (loss, ref)

    # Case 2: batch not a multiple of the tile -> exercises zero-padding and
    # multi-step accumulation across the batch grid (tb=8, 3 grid steps).
    za = jax.random.normal(k3, (20, 128), dtype=jnp.float32)
    zb = jax.random.normal(k4, (20, 128), dtype=jnp.float32)
    loss = vicreg_loss(za, zb, block_rows=8)
    jax.block_until_ready(loss)
    ref = _vicreg_loss_ref(za, zb)
    assert jnp.allclose(loss, ref, rtol=1e-4, atol=1e-4), (loss, ref)

    print("KERNEL_OK")
</pallas_src>

<mosaic_0001>
module attributes {stable_mosaic.version = 11 : i64} {
  func.func @kernel(%arg0: i32, %arg1: memref<8x32xf32, #tpu.memory_space<vmem>>, %arg2: memref<8x32xf32, #tpu.memory_space<vmem>>, %arg3: memref<1xf32, #tpu.memory_space<smem>>, %arg4: memref<32x32xf32, #tpu.memory_space<vmem>>, %arg5: memref<32x32xf32, #tpu.memory_space<vmem>>, %arg6: memref<1x32xf32, #tpu.memory_space<vmem>>, %arg7: memref<1x32xf32, #tpu.memory_space<vmem>>, %arg8: memref<1x32xf32, #tpu.memory_space<vmem>>, %arg9: memref<1x32xf32, #tpu.memory_space<vmem>>, %arg10: memref<1x32xf32, #tpu.memory_space<vmem>>) attributes {dimension_semantics = [#tpu.dimension_semantics<arbitrary>], iteration_bounds = array<i64: 1>, scalar_prefetch = 0 : i64, scratch_operands = 7 : i64, tpu.core_type = #tpu.core_type<tc>, window_params = [{transform_indices = @transform_0, window_bounds = array<i64: 8, 32>}, {transform_indices = @transform_1, window_bounds = array<i64: 8, 32>}, {transform_indices = @transform_2, window_bounds = array<i64: 1>}]} {
    %c0_i32 = arith.constant 0 : i32
    %0 = arith.cmpi eq, %arg0, %c0_i32 : i32
    %1 = arith.extui %0 : i1 to i32
    %c0_i32_0 = arith.constant 0 : i32
    %2 = arith.cmpi ne, %1, %c0_i32_0 : i32
    scf.if %2 {
      %cst_40 = arith.constant 0.000000e+00 : f32
      %45 = vector.broadcast %cst_40 : f32 to vector<32x32xf32>
      %c0_41 = arith.constant 0 : index
      %c0_42 = arith.constant 0 : index
      %46 = vector.load %arg4[%c0_41, %c0_42] : memref<32x32xf32, #tpu.memory_space<vmem>>, vector<32x32xf32>
      tpu.vector_store %arg4[%c0_41, %c0_42], %45 {strides = array<i32>} : memref<32x32xf32, #tpu.memory_space<vmem>>, vector<32x32xf32>,
      %cst_43 = arith.constant 0.000000e+00 : f32
      %47 = vector.broadcast %cst_43 : f32 to vector<32x32xf32>
      %c0_44 = arith.constant 0 : index
      %c0_45 = arith.constant 0 : index
      %48 = vector.load %arg5[%c0_44, %c0_45] : memref<32x32xf32, #tpu.memory_space<vmem>>, vector<32x32xf32>
      tpu.vector_store %arg5[%c0_44, %c0_45], %47 {strides = array<i32>} : memref<32x32xf32, #tpu.memory_space<vmem>>, vector<32x32xf32>,
      %cst_46 = arith.constant 0.000000e+00 : f32
      %49 = vector.broadcast %cst_46 : f32 to vector<1x32xf32>
      %c0_47 = arith.constant 0 : index
      %c0_48 = arith.constant 0 : index
      %50 = vector.load %arg6[%c0_47, %c0_48] : memref<1x32xf32, #tpu.memory_space<vmem>>, vector<1x32xf32>
      tpu.vector_store %arg6[%c0_47, %c0_48], %49 {strides = array<i32>} : memref<1x32xf32, #tpu.memory_space<vmem>>, vector<1x32xf32>,
      %cst_49 = arith.constant 0.000000e+00 : f32
      %51 = vector.broadcast %cst_49 : f32 to vector<1x32xf32>
      %c0_50 = arith.constant 0 : index
      %c0_51 = arith.constant 0 : index
      %52 = vector.load %arg7[%c0_50, %c0_51] : memref<1x32xf32, #tpu.memory_space<vmem>>, vector<1x32xf32>
      tpu.vector_store %arg7[%c0_50, %c0_51], %51 {strides = array<i32>} : memref<1x32xf32, #tpu.memory_space<vmem>>, vector<1x32xf32>,
      %cst_52 = arith.constant 0.000000e+00 : f32
      %53 = vector.broadcast %cst_52 : f32 to vector<1x32xf32>
      %c0_53 = arith.constant 0 : index
      %c0_54 = arith.constant 0 : index
      %54 = vector.load %arg8[%c0_53, %c0_54] : memref<1x32xf32, #tpu.memory_space<vmem>>, vector<1x32xf32>
      tpu.vector_store %arg8[%c0_53, %c0_54], %53 {strides = array<i32>} : memref<1x32xf32, #tpu.memory_space<vmem>>, vector<1x32xf32>,
      %cst_55 = arith.constant 0.000000e+00 : f32
      %55 = vector.broadcast %cst_55 : f32 to vector<1x32xf32>
      %c0_56 = arith.constant 0 : index
      %c0_57 = arith.constant 0 : index
      %56 = vector.load %arg9[%c0_56, %c0_57] : memref<1x32xf32, #tpu.memory_space<vmem>>, vector<1x32xf32>
      tpu.vector_store %arg9[%c0_56, %c0_57], %55 {strides = array<i32>} : memref<1x32xf32, #tpu.memory_space<vmem>>, vector<1x32xf32>,
      %cst_58 = arith.constant 0.000000e+00 : f32
      %57 = vector.broadcast %cst_58 : f32 to vector<1x32xf32>
      %c0_59 = arith.constant 0 : index
      %c0_60 = arith.constant 0 : index
      %58 = vector.load %arg10[%c0_59, %c0_60] : memref<1x32xf32, #tpu.memory_space<vmem>>, vector<1x32xf32>
      tpu.vector_store %arg10[%c0_59, %c0_60], %57 {strides = array<i32>} : memref<1x32xf32, #tpu.memory_space<vmem>>, vector<1x32xf32>,
    } else {
    }
    %c0 = arith.constant 0 : index
    %c0_1 = arith.constant 0 : index
    %3 = vector.load %arg1[%c0, %c0_1] : memref<8x32xf32, #tpu.memory_space<vmem>>, vector<8x32xf32>
    %c0_2 = arith.constant 0 : index
    %c0_3 = arith.constant 0 : index
    %4 = vector.load %arg2[%c0_2, %c0_3] : memref<8x32xf32, #tpu.memory_space<vmem>>, vector<8x32xf32>
    %c0_4 = arith.constant 0 : index
    %c0_5 = arith.constant 0 : index
    %5 = vector.load %arg4[%c0_4, %c0_5] : memref<32x32xf32, #tpu.memory_space<vmem>>, vector<32x32xf32>
    %cst = arith.constant dense<0.000000e+00> : vector<32x32xf32>
    %6 = tpu.matmul %3, %3, %cst {dimension_numbers = #tpu.dot_dimension_numbers<[0], [0], [1], [1], [0, 1, 1, 1], [], []>} : vector<8x32xf32>, vector<8x32xf32>, vector<32x32xf32> -> vector<32x32xf32>
    %7 = arith.addf %5, %6 : vector<32x32xf32>
    %c0_6 = arith.constant 0 : index
    %c0_7 = arith.constant 0 : index
    %8 = vector.load %arg4[%c0_6, %c0_7] : memref<32x32xf32, #tpu.memory_space<vmem>>, vector<32x32xf32>
    tpu.vector_store %arg4[%c0_6, %c0_7], %7 {strides = array<i32>} : memref<32x32xf32, #tpu.memory_space<vmem>>, vector<32x32xf32>,
    %c0_8 = arith.constant 0 : index
    %c0_9 = arith.constant 0 : index
    %9 = vector.load %arg5[%c0_8, %c0_9] : memref<32x32xf32, #tpu.memory_space<vmem>>, vector<32x32xf32>
    %cst_10 = arith.constant dense<0.000000e+00> : vector<32x32xf32>
    %10 = tpu.matmul %4, %4, %cst_10 {dimension_numbers = #tpu.dot_dimension_numbers<[0], [0], [1], [1], [0, 1, 1, 1], [], []>} : vector<8x32xf32>, vector<8x32xf32>, vector<32x32xf32> -> vector<32x32xf32>
    %11 = arith.addf %9, %10 : vector<32x32xf32>
    %c0_11 = arith.constant 0 : index
    %c0_12 = arith.constant 0 : index
    %12 = vector.load %arg5[%c0_11, %c0_12] : memref<32x32xf32, #tpu.memory_space<vmem>>, vector<32x32xf32>
    tpu.vector_store %arg5[%c0_11, %c0_12], %11 {strides = array<i32>} : memref<32x32xf32, #tpu.memory_space<vmem>>, vector<32x32xf32>,
    %c0_13 = arith.constant 0 : index
    %c0_14 = arith.constant 0 : index
    %13 = vector.load %arg6[%c0_13, %c0_14] : memref<1x32xf32, #tpu.memory_space<vmem>>, vector<1x32xf32>
    %cst_15 = arith.constant dense<0.000000e+00> : vector<32xf32>
    %14 = vector.multi_reduction <add>, %3, %cst_15 [0] : vector<8x32xf32> to vector<32xf32>
    %15 = vector.shape_cast %14 : vector<32xf32> to vector<1x32xf32>
    %16 = arith.addf %13, %15 : vector<1x32xf32>
    %c0_16 = arith.constant 0 : index
    %c0_17 = arith.constant 0 : index
    %17 = vector.load %arg6[%c0_16, %c0_17] : memref<1x32xf32, #tpu.memory_space<vmem>>, vector<1x32xf32>
    tpu.vector_store %arg6[%c0_16, %c0_17], %16 {strides = array<i32>} : memref<1x32xf32, #tpu.memory_space<vmem>>, vector<1x32xf32>,
    %c0_18 = arith.constant 0 : index
    %c0_19 = arith.constant 0 : index
    %18 = vector.load %arg7[%c0_18, %c0_19] : memref<1x32xf32, #tpu.memory_space<vmem>>, vector<1x32xf32>
    %cst_20 = arith.constant dense<0.000000e+00> : vector<32xf32>
    %19 = vector.multi_reduction <add>, %4, %cst_20 [0] : vector<8x32xf32> to vector<32xf32>
    %20 = vector.shape_cast %19 : vector<32xf32> to vector<1x32xf32>
    %21 = arith.addf %18, %20 : vector<1x32xf32>
    %c0_21 = arith.constant 0 : index
    %c0_22 = arith.constant 0 : index
    %22 = vector.load %arg7[%c0_21, %c0_22] : memref<1x32xf32, #tpu.memory_space<vmem>>, vector<1x32xf32>
    tpu.vector_store %arg7[%c0_21, %c0_22], %21 {strides = array<i32>} : memref<1x32xf32, #tpu.memory_space<vmem>>, vector<1x32xf32>,
    %c0_23 = arith.constant 0 : index
    %c0_24 = arith.constant 0 : index
    %23 = vector.load %arg8[%c0_23, %c0_24] : memref<1x32xf32, #tpu.memory_space<vmem>>, vector<1x32xf32>
    %24 = arith.mulf %3, %3 : vector<8x32xf32>
    %cst_25 = arith.constant dense<0.000000e+00> : vector<32xf32>
    %25 = vector.multi_reduction <add>, %24, %cst_25 [0] : vector<8x32xf32> to vector<32xf32>
    %26 = vector.shape_cast %25 : vector<32xf32> to vector<1x32xf32>
    %27 = arith.addf %23, %26 : vector<1x32xf32>
    %c0_26 = arith.constant 0 : index
    %c0_27 = arith.constant 0 : index
    %28 = vector.load %arg8[%c0_26, %c0_27] : memref<1x32xf32, #tpu.memory_space<vmem>>, vector<1x32xf32>
    tpu.vector_store %arg8[%c0_26, %c0_27], %27 {strides = array<i32>} : memref<1x32xf32, #tpu.memory_space<vmem>>, vector<1x32xf32>,
    %c0_28 = arith.constant 0 : index
    %c0_29 = arith.constant 0 : index
    %29 = vector.load %arg9[%c0_28, %c0_29] : memref<1x32xf32, #tpu.memory_space<vmem>>, vector<1x32xf32>
    %30 = arith.mulf %4, %4 : vector<8x32xf32>
    %cst_30 = arith.constant dense<0.000000e+00> : vector<32xf32>
    %31 = vector.multi_reduction <add>, %30, %cst_30 [0] : vector<8x32xf32> to vector<32xf32>
    %32 = vector.shape_cast %31 : vector<32xf32> to vector<1x32xf32>
    %33 = arith.addf %29, %32 : vector<1x32xf32>
    %c0_31 = arith.constant 0 : index
    %c0_32 = arith.constant 0 : index
    %34 = vector.load %arg9[%c0_31, %c0_32] : memref<1x32xf32, #tpu.memory_space<vmem>>, vector<1x32xf32>
    tpu.vector_store %arg9[%c0_31, %c0_32], %33 {strides = array<i32>} : memref<1x32xf32, #tpu.memory_space<vmem>>, vector<1x32xf32>,
    %35 = arith.subf %3, %4 : vector<8x32xf32>
    %c0_33 = arith.constant 0 : index
    %c0_34 = arith.constant 0 : index
    %36 = vector.load %arg10[%c0_33, %c0_34] : memref<1x32xf32, #tpu.memory_space<vmem>>, vector<1x32xf32>
    %37 = arith.mulf %35, %35 : vector<8x32xf32>
    %cst_35 = arith.constant dense<0.000000e+00> : vector<32xf32>
    %38 = vector.multi_reduction <add>, %37, %cst_35 [0] : vector<8x32xf32> to vector<32xf32>
    %39 = vector.shape_cast %38 : vector<32xf32> to vector<1x32xf32>
    %40 = arith.addf %36, %39 : vector<1x32xf32>
    %c0_36 = arith.constant 0 : index
    %c0_37 = arith.constant 0 : index
    %41 = vector.load %arg10[%c0_36, %c0_37] : memref<1x32xf32, #tpu.memory_space<vmem>>, vector<1x32xf32>
    tpu.vector_store %arg10[%c0_36, %c0_37], %40 {strides = array<i32>} : memref<1x32xf32, #tpu.memory_space<vmem>>, vector<1x32xf32>,
    %c0_i32_38 = arith.constant 0 : i32
    %42 = arith.cmpi eq, %arg0, %c0_i32_38 : i32
    %43 = arith.extui %42 : i1 to i32
    %c0_i32_39 = arith.constant 0 : i32
    %44 = arith.cmpi ne, %43, %c0_i32_39 : i32
    scf.if %44 {
      %c0_40 = arith.constant 0 : index
      %c0_41 = arith.constant 0 : index
      %45 = vector.load %arg10[%c0_40, %c0_41] : memref<1x32xf32, #tpu.memory_space<vmem>>, vector<1x32xf32>
      %46 = vector.shape_cast %45 : vector<1x32xf32> to vector<1x1x32xf32>
      %cst_42 = arith.constant dense<0.000000e+00> : vector<1xf32>
      %47 = vector.multi_reduction <add>, %46, %cst_42 [1, 2] : vector<1x1x32xf32> to vector<1xf32>
      %48 = vector.shape_cast %47 : vector<1xf32> to vector<1x1x1xf32>
      %49 = vector.extract %48[0, 0, 0] : f32 from vector<1x1x1xf32>
      %cst_43 = arith.constant 3.906250e-03 : f32
      %50 = arith.mulf %49, %cst_43 : f32
      %c0_44 = arith.constant 0 : index
      %c0_45 = arith.constant 0 : index
      %51 = vector.load %arg6[%c0_44, %c0_45] : memref<1x32xf32, #tpu.memory_space<vmem>>, vector<1x32xf32>
      %c0_46 = arith.constant 0 : index
      %c0_47 = arith.constant 0 : index
      %52 = vector.load %arg8[%c0_46, %c0_47] : memref<1x32xf32, #tpu.memory_space<vmem>>, vector<1x32xf32>
      %53 = arith.mulf %51, %51 : vector<1x32xf32>
      %cst_48 = arith.constant 1.250000e-01 : f32
      %54 = vector.broadcast %cst_48 : f32 to vector<1x32xf32>
      %55 = arith.mulf %53, %54 : vector<1x32xf32>
      %56 = arith.subf %52, %55 : vector<1x32xf32>
      %cst_49 = arith.constant 0.142857149 : f32
      %57 = vector.broadcast %cst_49 : f32 to vector<1x32xf32>
      %58 = arith.mulf %56, %57 : vector<1x32xf32>
      %cst_50 = arith.constant 9.99999974E-5 : f32
      %59 = vector.broadcast %cst_50 : f32 to vector<1x32xf32>
      %60 = arith.addf %58, %59 : vector<1x32xf32>
      %61 = math.sqrt %60 : vector<1x32xf32>
      %cst_51 = arith.constant 1.000000e+00 : f32
      %62 = vector.broadcast %cst_51 : f32 to vector<1x32xf32>
      %63 = arith.subf %62, %61 : vector<1x32xf32>
      %cst_52 = arith.constant 0.000000e+00 : f32
      %64 = vector.broadcast %cst_52 : f32 to vector<1x32xf32>
      %65 = arith.maximumf %64, %63 : vector<1x32xf32>
      %66 = vector.shape_cast %65 : vector<1x32xf32> to vector<1x1x32xf32>
      %cst_53 = arith.constant dense<0.000000e+00> : vector<1xf32>
      %67 = vector.multi_reduction <add>, %66, %cst_53 [1, 2] : vector<1x1x32xf32> to vector<1xf32>
      %68 = vector.shape_cast %67 : vector<1xf32> to vector<1x1x1xf32>
      %69 = vector.extract %68[0, 0, 0] : f32 from vector<1x1x1xf32>
      %cst_54 = arith.constant 3.125000e-02 : f32
      %70 = arith.mulf %69, %cst_54 : f32
      %cst_55 = arith.constant dense<0.000000e+00> : vector<32x32xf32>
      %71 = tpu.matmul %51, %51, %cst_55 {dimension_numbers = #tpu.dot_dimension_numbers<[0], [0], [1], [1], [0, 1, 1, 1], [], []>} : vector<1x32xf32>, vector<1x32xf32>, vector<32x32xf32> -> vector<32x32xf32>
      %c0_56 = arith.constant 0 : index
      %c0_57 = arith.constant 0 : index
      %72 = vector.load %arg4[%c0_56, %c0_57] : memref<32x32xf32, #tpu.memory_space<vmem>>, vector<32x32xf32>
      %cst_58 = arith.constant 1.250000e-01 : f32
      %73 = vector.broadcast %cst_58 : f32 to vector<32x32xf32>
      %74 = arith.mulf %71, %73 : vector<32x32xf32>
      %75 = arith.subf %72, %74 : vector<32x32xf32>
      %76 = arith.mulf %75, %75 : vector<32x32xf32>
      %77 = vector.shape_cast %76 : vector<32x32xf32> to vector<1x32x32xf32>
      %cst_59 = arith.constant dense<0.000000e+00> : vector<1xf32>
      %78 = vector.multi_reduction <add>, %77, %cst_59 [1, 2] : vector<1x32x32xf32> to vector<1xf32>
      %79 = vector.shape_cast %78 : vector<1xf32> to vector<1x1x1xf32>
      %80 = vector.extract %79[0, 0, 0] : f32 from vector<1x1x1xf32>
      %81 = arith.mulf %56, %56 : vector<1x32xf32>
      %82 = vector.shape_cast %81 : vector<1x32xf32> to vector<1x1x32xf32>
      %cst_60 = arith.constant dense<0.000000e+00> : vector<1xf32>
      %83 = vector.multi_reduction <add>, %82, %cst_60 [1, 2] : vector<1x1x32xf32> to vector<1xf32>
      %84 = vector.shape_cast %83 : vector<1xf32> to vector<1x1x1xf32>
      %85 = vector.extract %84[0, 0, 0] : f32 from vector<1x1x1xf32>
      %86 = arith.subf %80, %85 : f32
      %cst_61 = arith.constant 6.37755089E-4 : f32
      %87 = arith.mulf %86, %cst_61 : f32
      %c0_62 = arith.constant 0 : index
      %c0_63 = arith.constant 0 : index
      %88 = vector.load %arg7[%c0_62, %c0_63] : memref<1x32xf32, #tpu.memory_space<vmem>>, vector<1x32xf32>
      %c0_64 = arith.constant 0 : index
      %c0_65 = arith.constant 0 : index
      %89 = vector.load %arg9[%c0_64, %c0_65] : memref<1x32xf32, #tpu.memory_space<vmem>>, vector<1x32xf32>
      %90 = arith.mulf %88, %88 : vector<1x32xf32>
      %cst_66 = arith.constant 1.250000e-01 : f32
      %91 = vector.broadcast %cst_66 : f32 to vector<1x32xf32>
      %92 = arith.mulf %90, %91 : vector<1x32xf32>
      %93 = arith.subf %89, %92 : vector<1x32xf32>
      %cst_67 = arith.constant 0.142857149 : f32
      %94 = vector.broadcast %cst_67 : f32 to vector<1x32xf32>
      %95 = arith.mulf %93, %94 : vector<1x32xf32>
      %cst_68 = arith.constant 9.99999974E-5 : f32
      %96 = vector.broadcast %cst_68 : f32 to vector<1x32xf32>
      %97 = arith.addf %95, %96 : vector<1x32xf32>
      %98 = math.sqrt %97 : vector<1x32xf32>
      %cst_69 = arith.constant 1.000000e+00 : f32
      %99 = vector.broadcast %cst_69 : f32 to vector<1x32xf32>
      %100 = arith.subf %99, %98 : vector<1x32xf32>
      %cst_70 = arith.constant 0.000000e+00 : f32
      %101 = vector.broadcast %cst_70 : f32 to vector<1x32xf32>
      %102 = arith.maximumf %101, %100 : vector<1x32xf32>
      %103 = vector.shape_cast %102 : vector<1x32xf32> to vector<1x1x32xf32>
      %cst_71 = arith.constant dense<0.000000e+00> : vector<1xf32>
      %104 = vector.multi_reduction <add>, %103, %cst_71 [1, 2] : vector<1x1x32xf32> to vector<1xf32>
      %105 = vector.shape_cast %104 : vector<1xf32> to vector<1x1x1xf32>
      %106 = vector.extract %105[0, 0, 0] : f32 from vector<1x1x1xf32>
      %cst_72 = arith.constant 3.125000e-02 : f32
      %107 = arith.mulf %106, %cst_72 : f32
      %cst_73 = arith.constant dense<0.000000e+00> : vector<32x32xf32>
      %108 = tpu.matmul %88, %88, %cst_73 {dimension_numbers = #tpu.dot_dimension_numbers<[0], [0], [1], [1], [0, 1, 1, 1], [], []>} : vector<1x32xf32>, vector<1x32xf32>, vector<32x32xf32> -> vector<32x32xf32>
      %c0_74 = arith.constant 0 : index
      %c0_75 = arith.constant 0 : index
      %109 = vector.load %arg5[%c0_74, %c0_75] : memref<32x32xf32, #tpu.memory_space<vmem>>, vector<32x32xf32>
      %cst_76 = arith.constant 1.250000e-01 : f32
      %110 = vector.broadcast %cst_76 : f32 to vector<32x32xf32>
      %111 = arith.mulf %108, %110 : vector<32x32xf32>
      %112 = arith.subf %109, %111 : vector<32x32xf32>
      %113 = arith.mulf %112, %112 : vector<32x32xf32>
      %114 = vector.shape_cast %113 : vector<32x32xf32> to vector<1x32x32xf32>
      %cst_77 = arith.constant dense<0.000000e+00> : vector<1xf32>
      %115 = vector.multi_reduction <add>, %114, %cst_77 [1, 2] : vector<1x32x32xf32> to vector<1xf32>
      %116 = vector.shape_cast %115 : vector<1xf32> to vector<1x1x1xf32>
      %117 = vector.extract %116[0, 0, 0] : f32 from vector<1x1x1xf32>
      %118 = arith.mulf %93, %93 : vector<1x32xf32>
      %119 = vector.shape_cast %118 : vector<1x32xf32> to vector<1x1x32xf32>
      %cst_78 = arith.constant dense<0.000000e+00> : vector<1xf32>
      %120 = vector.multi_reduction <add>, %119, %cst_78 [1, 2] : vector<1x1x32xf32> to vector<1xf32>
      %121 = vector.shape_cast %120 : vector<1xf32> to vector<1x1x1xf32>
      %122 = vector.extract %121[0, 0, 0] : f32 from vector<1x1x1xf32>
      %123 = arith.subf %117, %122 : f32
      %cst_79 = arith.constant 6.37755089E-4 : f32
      %124 = arith.mulf %123, %cst_79 : f32
      %cst_80 = arith.constant 2.500000e+01 : f32
      %125 = arith.mulf %cst_80, %50 : f32
      %126 = arith.addf %70, %107 : f32
      %cst_81 = arith.constant 1.250000e+01 : f32
      %127 = arith.mulf %cst_81, %126 : f32
      %128 = arith.addf %125, %127 : f32
      %129 = arith.addf %87, %124 : f32
      %cst_82 = arith.constant 1.000000e+00 : f32
      %130 = arith.mulf %cst_82, %129 : f32
      %131 = arith.addf %128, %130 : f32
      %c0_83 = arith.constant 0 : index
      %132 = memref.load %arg3[%c0_83] : memref<1xf32, #tpu.memory_space<smem>>
      memref.store %131, %arg3[%c0_83] : memref<1xf32, #tpu.memory_space<smem>>
    } else {
    }
    return
  }
  func.func @transform_0(%arg0: i32) -> (i32, i32) {
    %c0_i32 = arith.constant 0 : i32
    %c0_i32_0 = arith.constant 0 : i32
    return %arg0, %c0_i32 : i32, i32
  }
  func.func @transform_1(%arg0: i32) -> (i32, i32) {
    %c0_i32 = arith.constant 0 : i32
    %c0_i32_0 = arith.constant 0 : i32
    return %arg0, %c0_i32 : i32, i32
  }
  func.func @transform_2(%arg0: i32) -> i32 {
    %c0_i32 = arith.constant 0 : i32
    %c0_i32_0 = arith.constant 0 : i32
    return %c0_i32 : i32
  }
}

</mosaic_0001>

<llo_original>
// kernel: vicreg_loss.1
$region0: #{vicreg_loss.1}
  #allocation0 [shape = 'u32[]', space=smem, size = 0x4, offset = 0x4, fixed_abs, tag = 'smem constant byte address 0x4 - core index']
  #allocation1 [shape = 'u32[72,128]{1,0:T(1,128)}', space=vmem, size = 0x9000, scoped, tag = 'internal scratch']
  #allocation2 [shape = 'f32[32,32]{1,0:T(8,128)}', space=vmem, size = 0x4000, scoped, tag = 'scratch operand']
  #allocation3 [shape = 'f32[32,32]{1,0:T(8,128)}', space=vmem, size = 0x4000, scoped, tag = 'scratch operand']
  #allocation4 [shape = 'f32[1,32]{1,0:T(1,128)}', space=vmem, size = 0x200, scoped, tag = 'scratch operand']
  #allocation5 [shape = 'f32[1,32]{1,0:T(1,128)}', space=vmem, size = 0x200, scoped, tag = 'scratch operand']
  #allocation6 [shape = 'f32[1,32]{1,0:T(1,128)}', space=vmem, size = 0x200, scoped, tag = 'scratch operand']
  #allocation7 [shape = 'f32[1,32]{1,0:T(1,128)}', space=vmem, size = 0x200, scoped, tag = 'scratch operand']
  #allocation8 [shape = 'f32[1,32]{1,0:T(1,128)}', space=vmem, size = 0x200, scoped, tag = 'scratch operand']
  %s0 = inlined_call_operand.hbm [shape: f32[8,32], index: 0, kind: input, shape index: {}]
  %s1 = inlined_call_operand.hbm [shape: f32[8,32], index: 1, kind: input, shape index: {}]
  %s2 = inlined_call_operand.hbm [shape: f32[1], index: 2, kind: output, shape index: {}]
  %s3 = sld [smem:[#allocation0]]
  $region34: #{vicreg_loss.1} parent=0
    _
  %s5 = ssub.s32 1, %s3
  %s6 = scalar_select 0, %s5, %s3
  $region1: #{vicreg_loss.1} parent=0
    #allocation9 [shape = 'u8[4096]{0}', space=vmem, size = 0x1000, scoped, tag = 'input window, operand 0, single buffered']
    #allocation10 [shape = 's32[1]{0}', space=sflag, size = 0x4, scoped, tag = 'scoped memory for vicreg_loss.1']
    #allocation11 [shape = 's32[1]{0}', space=sflag, size = 0x4, scoped, tag = 'scoped memory for vicreg_loss.1']
    #allocation12 [shape = 'u8[4096]{0}', space=vmem, size = 0x1000, scoped, tag = 'input window, operand 1, single buffered']
    #allocation13 [shape = 's32[1]{0}', space=sflag, size = 0x4, scoped, tag = 'scoped memory for vicreg_loss.1']
    #allocation14 [shape = 'u8[512]{0}', space=smem, size = 0x200, scoped, tag = 'output window, operand 0, single buffered']
    %7 = vsyncpa [#allocation10], 0
    %8 = vsyncpa [#allocation13], 0
    %9 = vsyncpa [#allocation11], 0
    // Predicated region
    $region2: #{vicreg_loss.1} parent=1 // pred_check
      _
    $region3: #{vicreg_loss.1} parent=1 // pred_check_branch
      %11 = sbr.rel (0) target = $region5
    $region4: #{vicreg_loss.1} parent=1 // pred_region
      %13 = vsyncadd [#allocation10], 0
      %s15 = sshll.u32 %s0, 4
      %s16 = int_to_ptr.hbm [resolvable:$true] %s15
      %s17 = sshll.u32 [#allocation9], 4
      %s18 = int_to_ptr.vmem [resolvable:$true] %s17
      %20 = dma.hbm_to_vmem [thread:$0]  %s16, 128, %s18, [#allocation10]
    $region5: #{vicreg_loss.1} parent=1 // pred_fallthru
      _
    // Predicated region
    $region6: #{vicreg_loss.1} parent=1 // pred_check
      _
    $region7: #{vicreg_loss.1} parent=1 // pred_check_branch
      %22 = sbr.rel (0) target = $region9
    $region8: #{vicreg_loss.1} parent=1 // pred_region
      %24 = vsyncadd [#allocation13], 0
      %s26 = sshll.u32 %s1, 4
      %s27 = int_to_ptr.hbm [resolvable:$true] %s26
      %s28 = sshll.u32 [#allocation12], 4
      %s29 = int_to_ptr.vmem [resolvable:$true] %s28
      %31 = dma.hbm_to_vmem [thread:$0]  %s27, 128, %s29, [#allocation13]
    $region9: #{vicreg_loss.1} parent=1 // pred_fallthru
      _
    // Predicated region
    $region10: #{vicreg_loss.1} parent=1 // pred_check
      _
    $region11: #{vicreg_loss.1} parent=1 // pred_check_branch
      %33 = sbr.rel (0) target = $region13
    $region12: #{vicreg_loss.1} parent=1 // pred_region
      %35 = dma.done [#allocation10], 128
    $region13: #{vicreg_loss.1} parent=1 // pred_fallthru
      _
    // Predicated region
    $region14: #{vicreg_loss.1} parent=1 // pred_check
      _
    $region15: #{vicreg_loss.1} parent=1 // pred_check_branch
      %37 = sbr.rel (0) target = $region17
    $region16: #{vicreg_loss.1} parent=1 // pred_region
      %39 = dma.done [#allocation13], 128
    $region17: #{vicreg_loss.1} parent=1 // pred_fallthru
      _
    %p40 = scmp.eq.s32.totalorder 0, 0
    // Predicated region
    $region18: #{vicreg_loss.1} parent=1 // pred_check
      %p41 = pneg %p40
    $region19: #{vicreg_loss.1} parent=1 // pred_check_branch
      %43 = sbr.rel (%p41) target = $region21
    $region20: #{vicreg_loss.1} parent=1 // pred_region
      %vm44 = vcmask 261120
      %45 = vst.msk [vmem:[#allocation2] sm:$0xff] %vm44, 0.0
      %46 = vst.msk [vmem:[#allocation2 + $0x8] sm:$0xff] %vm44, 0.0
      %47 = vst.msk [vmem:[#allocation2 + $0x10] sm:$0xff] %vm44, 0.0
      %48 = vst.msk [vmem:[#allocation2 + $0x18] sm:$0xff] %vm44, 0.0
      %49 = vst.msk [vmem:[#allocation3] sm:$0xff] %vm44, 0.0
      %50 = vst.msk [vmem:[#allocation3 + $0x8] sm:$0xff] %vm44, 0.0
      %51 = vst.msk [vmem:[#allocation3 + $0x10] sm:$0xff] %vm44, 0.0
      %52 = vst.msk [vmem:[#allocation3 + $0x18] sm:$0xff] %vm44, 0.0
      %vm53 = vcmask 253952
      %54 = vst.msk [vmem:[#allocation4] sm:$0x1] %vm53, 0.0
      %55 = vst.msk [vmem:[#allocation5] sm:$0x1] %vm53, 0.0
      %56 = vst.msk [vmem:[#allocation6] sm:$0x1] %vm53, 0.0
      %57 = vst.msk [vmem:[#allocation7] sm:$0x1] %vm53, 0.0
      %58 = vst.msk [vmem:[#allocation8] sm:$0x1] %vm53, 0.0
    $region21: #{vicreg_loss.1} parent=1 // pred_fallthru
      _
    %v59 = vld [vmem:[#allocation9] sm:$0xff]
    %v60 = vld [vmem:[#allocation12] sm:$0xff]
    %v61 = vld [vmem:[#allocation2] sm:$0xff]
    %v62 = vld [vmem:[#allocation2 + $0x8] sm:$0xff]
    %v63 = vld [vmem:[#allocation2 + $0x10] sm:$0xff]
    %v64 = vld [vmem:[#allocation2 + $0x18] sm:$0xff]
    %65 = vxpose.xlu0.b32.start [1/16] %v59, 128
    %66 = vxpose.xlu0.b32.cont [2/16] 0.0, 128
    %67 = vxpose.xlu0.b32.cont [3/16] 0.0, 128
    %68 = vxpose.xlu0.b32.cont [4/16] 0.0, 128
    %69 = vxpose.xlu0.b32.cont [5/16] 0.0, 128
    %70 = vxpose.xlu0.b32.cont [6/16] 0.0, 128
    %71 = vxpose.xlu0.b32.cont [7/16] 0.0, 128
    %72 = vxpose.xlu0.b32.cont [8/16] 0.0, 128
    %73 = vxpose.xlu0.b32.cont [9/16] 0.0, 128
    %74 = vxpose.xlu0.b32.cont [10/16] 0.0, 128
    %75 = vxpose.xlu0.b32.cont [11/16] 0.0, 128
    %76 = vxpose.xlu0.b32.cont [12/16] 0.0, 128
    %77 = vxpose.xlu0.b32.cont [13/16] 0.0, 128
    %78 = vxpose.xlu0.b32.cont [14/16] 0.0, 128
    %79 = vxpose.xlu0.b32.cont [15/16] 0.0, 128
    %80 = vxpose.xlu0.b32.end [16/16] 0.0, 128
    %v81 = vpop.trf.xlu0
    %v82 = vpop.trf.xlu0
    %v83 = vpop.trf.xlu0
    %v84 = vpop.trf.xlu0
    %v85 = vpop.trf.xlu0
    %v86 = vpop.trf.xlu0
    %v87 = vpop.trf.xlu0
    %v88 = vpop.trf.xlu0
    %v89 = vpop.trf.xlu0
    %v90 = vpop.trf.xlu0
    %v91 = vpop.trf.xlu0
    %v92 = vpop.trf.xlu0
    %v93 = vpop.trf.xlu0
    %v94 = vpop.trf.xlu0
    %v95 = vpop.trf.xlu0
    %v96 = vpop.trf.xlu0
    %vm97 = vcmask 64512
    %v99 = vsel %vm97, %v81, 0
    %v102 = vsel %vm97, %v82, 0
    %v105 = vsel %vm97, %v83, 0
    %v108 = vsel %vm97, %v84, 0
    %110 = vmatpush.msra.mxu0 0.0
    %111 = vmatpush.msra.mxu0 0.0
    %112 = vmatpush.msra.mxu0 0.0
    %113 = vmatpush.msra.mxu0 0.0
    %114 = vmatpush.msra.mxu0 0.0
    %115 = vmatpush.msra.mxu0 0.0
    %116 = vmatpush.msra.mxu0 0.0
    %117 = vmatpush.msra.mxu0 0.0
    %118 = vmatpush.msra.mxu0 0.0
    %119 = vmatpush.msra.mxu0 0.0
    %120 = vmatpush.msra.mxu0 0.0
    %121 = vmatpush.msra.mxu0 0.0
    %122 = vmatpush.msra.mxu0 0.0
    %123 = vmatpush.msra.mxu0 0.0
    %124 = vmatpush.msra.mxu0 0.0
    %125 = vmatpush.msra.mxu0 %v59
    %126 = vmatmul.f32.gmra.mxu0 %v99
    %v127 = vpop.f32.mrf.mxu0
    %v128 = vadd.f32 0.0, %v127
    %129 = vmatmul.f32.gmra.mxu0 %v102
    %v130 = vpop.f32.mrf.mxu0
    %v131 = vadd.f32 0.0, %v130
    %132 = vmatmul.f32.gmra.mxu0 %v105
    %v133 = vpop.f32.mrf.mxu0
    %v134 = vadd.f32 0.0, %v133
    %135 = vmatmul.f32.gmra.mxu0 %v108
    %v136 = vpop.f32.mrf.mxu0
    %v137 = vadd.f32 0.0, %v136
    %138 = vdwg.mxu0
    %v139 = vadd.f32 %v61, %v128
    %v140 = vadd.f32 %v62, %v131
    %v141 = vadd.f32 %v63, %v134
    %v142 = vadd.f32 %v64, %v137
    %vm143 = vcmask 261120
    %144 = vst.msk [vmem:[#allocation2] sm:$0xff] %vm143, %v139
    %145 = vst.msk [vmem:[#allocation2 + $0x8] sm:$0xff] %vm143, %v140
    %146 = vst.msk [vmem:[#allocation2 + $0x10] sm:$0xff] %vm143, %v141
    %147 = vst.msk [vmem:[#allocation2 + $0x18] sm:$0xff] %vm143, %v142
    %v148 = vld [vmem:[#allocation3] sm:$0xff]
    %v149 = vld [vmem:[#allocation3 + $0x8] sm:$0xff]
    %v150 = vld [vmem:[#allocation3 + $0x10] sm:$0xff]
    %v151 = vld [vmem:[#allocation3 + $0x18] sm:$0xff]
    %152 = vxpose.xlu0.b32.start [1/16] %v60, 128
    %153 = vxpose.xlu0.b32.cont [2/16] 0.0, 128
    %154 = vxpose.xlu0.b32.cont [3/16] 0.0, 128
    %155 = vxpose.xlu0.b32.cont [4/16] 0.0, 128
    %156 = vxpose.xlu0.b32.cont [5/16] 0.0, 128
    %157 = vxpose.xlu0.b32.cont [6/16] 0.0, 128
    %158 = vxpose.xlu0.b32.cont [7/16] 0.0, 128
    %159 = vxpose.xlu0.b32.cont [8/16] 0.0, 128
    %160 = vxpose.xlu0.b32.cont [9/16] 0.0, 128
    %161 = vxpose.xlu0.b32.cont [10/16] 0.0, 128
    %162 = vxpose.xlu0.b32.cont [11/16] 0.0, 128
    %163 = vxpose.xlu0.b32.cont [12/16] 0.0, 128
    %164 = vxpose.xlu0.b32.cont [13/16] 0.0, 128
    %165 = vxpose.xlu0.b32.cont [14/16] 0.0, 128
    %166 = vxpose.xlu0.b32.cont [15/16] 0.0, 128
    %167 = vxpose.xlu0.b32.end [16/16] 0.0, 128
    %v168 = vpop.trf.xlu0
    %v169 = vpop.trf.xlu0
    %v170 = vpop.trf.xlu0
    %v171 = vpop.trf.xlu0
    %v172 = vpop.trf.xlu0
    %v173 = vpop.trf.xlu0
    %v174 = vpop.trf.xlu0
    %v175 = vpop.trf.xlu0
    %v176 = vpop.trf.xlu0
    %v177 = vpop.trf.xlu0
    %v178 = vpop.trf.xlu0
    %v179 = vpop.trf.xlu0
    %v180 = vpop.trf.xlu0
    %v181 = vpop.trf.xlu0
    %v182 = vpop.trf.xlu0
    %v183 = vpop.trf.xlu0
    %v185 = vsel %vm97, %v168, 0
    %v188 = vsel %vm97, %v169, 0
    %v191 = vsel %vm97, %v170, 0
    %v194 = vsel %vm97, %v171, 0
    %196 = vmatpush.msra.mxu0 0.0
    %197 = vmatpush.msra.mxu0 0.0
    %198 = vmatpush.msra.mxu0 0.0
    %199 = vmatpush.msra.mxu0 0.0
    %200 = vmatpush.msra.mxu0 0.0
    %201 = vmatpush.msra.mxu0 0.0
    %202 = vmatpush.msra.mxu0 0.0
    %203 = vmatpush.msra.mxu0 0.0
    %204 = vmatpush.msra.mxu0 0.0
    %205 = vmatpush.msra.mxu0 0.0
    %206 = vmatpush.msra.mxu0 0.0
    %207 = vmatpush.msra.mxu0 0.0
    %208 = vmatpush.msra.mxu0 0.0
    %209 = vmatpush.msra.mxu0 0.0
    %210 = vmatpush.msra.mxu0 0.0
    %211 = vmatpush.msra.mxu0 %v60
    %212 = vmatmul.f32.gmra.mxu0 %v185
    %v213 = vpop.f32.mrf.mxu0
    %v214 = vadd.f32 0.0, %v213
    %215 = vmatmul.f32.gmra.mxu0 %v188
    %v216 = vpop.f32.mrf.mxu0
    %v217 = vadd.f32 0.0, %v216
    %218 = vmatmul.f32.gmra.mxu0 %v191
    %v219 = vpop.f32.mrf.mxu0
    %v220 = vadd.f32 0.0, %v219
    %221 = vmatmul.f32.gmra.mxu0 %v194
    %v222 = vpop.f32.mrf.mxu0
    %v223 = vadd.f32 0.0, %v222
    %224 = vdwg.mxu0
    %v225 = vadd.f32 %v148, %v214
    %v226 = vadd.f32 %v149, %v217
    %v227 = vadd.f32 %v150, %v220
    %v228 = vadd.f32 %v151, %v223
    %229 = vst.msk [vmem:[#allocation3] sm:$0xff] %vm143, %v225
    %230 = vst.msk [vmem:[#allocation3 + $0x8] sm:$0xff] %vm143, %v226
    %231 = vst.msk [vmem:[#allocation3 + $0x10] sm:$0xff] %vm143, %v227
    %232 = vst.msk [vmem:[#allocation3 + $0x18] sm:$0xff] %vm143, %v228
    %v233 = vld [vmem:[#allocation4] sm:$0x1]
    %v234 = vsel %vm143, %v59, 0.0
    %v235 = vrot.slane %v234, 4
    %v236 = vadd.f32 %v234, %v235
    %v237 = vrot.slane %v236, 2
    %v238 = vadd.f32 %v236, %v237
    %v239 = vrot.slane %v238, 1
    %v240 = vadd.f32 %v238, %v239
    %v241 = vadd.f32 %v233, %v240
    %vm242 = vcmask 253952
    %243 = vst.msk [vmem:[#allocation4] sm:$0x1] %vm242, %v241
    %v244 = vld [vmem:[#allocation5] sm:$0x1]
    %v245 = vsel %vm143, %v60, 0.0
    %v246 = vrot.slane %v245, 4
    %v247 = vadd.f32 %v245, %v246
    %v248 = vrot.slane %v247, 2
    %v249 = vadd.f32 %v247, %v248
    %v250 = vrot.slane %v249, 1
    %v251 = vadd.f32 %v249, %v250
    %v252 = vadd.f32 %v244, %v251
    %253 = vst.msk [vmem:[#allocation5] sm:$0x1] %vm242, %v252
    %v254 = vld [vmem:[#allocation6] sm:$0x1]
    %v255 = vmul.f32 %v59, %v59
    %v256 = vsel %vm143, %v255, 0.0
    %v257 = vrot.slane %v256, 4
    %v258 = vadd.f32 %v256, %v257
    %v259 = vrot.slane %v258, 2
    %v260 = vadd.f32 %v258, %v259
    %v261 = vrot.slane %v260, 1
    %v262 = vadd.f32 %v260, %v261
    %v263 = vadd.f32 %v254, %v262
    %264 = vst.msk [vmem:[#allocation6] sm:$0x1] %vm242, %v263
    %v265 = vld [vmem:[#allocation7] sm:$0x1]
    %v266 = vmul.f32 %v60, %v60
    %v267 = vsel %vm143, %v266, 0.0
    %v268 = vrot.slane %v267, 4
    %v269 = vadd.f32 %v267, %v268
    %v270 = vrot.slane %v269, 2
    %v271 = vadd.f32 %v269, %v270
    %v272 = vrot.slane %v271, 1
    %v273 = vadd.f32 %v271, %v272
    %v274 = vadd.f32 %v265, %v273
    %275 = vst.msk [vmem:[#allocation7] sm:$0x1] %vm242, %v274
    %v276 = vsub.f32 %v59, %v60
    %v277 = vld [vmem:[#allocation8] sm:$0x1]
    %v278 = vmul.f32 %v276, %v276
    %v279 = vsel %vm143, %v278, 0.0
    %v280 = vrot.slane %v279, 4
    %v281 = vadd.f32 %v279, %v280
    %v282 = vrot.slane %v281, 2
    %v283 = vadd.f32 %v281, %v282
    %v284 = vrot.slane %v283, 1
    %v285 = vadd.f32 %v283, %v284
    %v286 = vadd.f32 %v277, %v285
    %287 = vst.msk [vmem:[#allocation8] sm:$0x1] %vm242, %v286
    // Predicated region
    $region22: #{vicreg_loss.1} parent=1 // pred_check
      %p288 = pneg %p40
    $region23: #{vicreg_loss.1} parent=1 // pred_check_branch
      %290 = sbr.rel (%p288) target = $region25
    $region24: #{vicreg_loss.1} parent=1 // pred_region
      %v291 = vld [vmem:[#allocation8] sm:$0x1]
      %v292 = vsel %vm242, %v291, 0.0
      %293 = vadd.xlane.f32.xlu0 %v292
      %v294 = vpop.xlane.xlu0 %293
      %v295 = vrot.slane %v294, 4
      %v296 = vadd.f32 %v294, %v295
      %v297 = vrot.slane %v296, 2
      %v298 = vadd.f32 %v296, %v297
      %v299 = vrot.slane %v298, 1
      %v300 = vadd.f32 %v298, %v299
      %s301 = vtos %v300
      %s302 = smul.f32 %s301, 0.00390625
      %v303 = vld [vmem:[#allocation4] sm:$0x1]
      %v304 = vld [vmem:[#allocation6] sm:$0x1]
      %v305 = vmul.f32 %v303, %v303
      %v306 = vmul.f32 %v305, 0.125
      %v307 = vsub.f32 %v304, %v306
      %v308 = vmul.f32 %v307, 0.14285715
      %v309 = vadd.f32 %v308, 0.0001
      %v310 = vrsqrt.pop %v309
      %v311 = vmul.f32 %v310, %v309
      %v312 = vmul.f32 %v311, %v310
      %v313 = vmul.f32 0.5, %v312
      %v314 = vsub.f32 1.5, %v313
      %v315 = vmul.f32 %v310, %v314
      %v316 = vmul.f32 %v309, %v315
      %vm317 = vcmp.eq.f32.partialorder %v309, inf
      %v318 = vsel %vm317, %v309, %v316
      %vm319 = vcmp.eq.f32.partialorder %v309, 0.0
      %v320 = vand.u32 %v309, 2147483648
      %v321 = vsel %vm319, %v320, %v318
      %v322 = vsub.f32 1.0, %v321
      %v323 = vmax.f32 %v322, 0.0
      %v324 = vsel %vm242, %v323, 0.0
      %325 = vadd.xlane.f32.xlu0 %v324
      %v326 = vpop.xlane.xlu0 %325
      %v327 = vrot.slane %v326, 4
      %v328 = vadd.f32 %v326, %v327
      %v329 = vrot.slane %v328, 2
      %v330 = vadd.f32 %v328, %v329
      %v331 = vrot.slane %v330, 1
      %v332 = vadd.f32 %v330, %v331
      %s333 = vtos %v332
      %s334 = smul.f32 %s333, 0.03125
      %335 = vxpose.xlu0.b32.start [1/16] %v303, 128
      %336 = vxpose.xlu0.b32.cont [2/16] 0.0, 128
      %337 = vxpose.xlu0.b32.cont [3/16] 0.0, 128
      %338 = vxpose.xlu0.b32.cont [4/16] 0.0, 128
      %339 = vxpose.xlu0.b32.cont [5/16] 0.0, 128
      %340 = vxpose.xlu0.b32.cont [6/16] 0.0, 128
      %341 = vxpose.xlu0.b32.cont [7/16] 0.0, 128
      %342 = vxpose.xlu0.b32.cont [8/16] 0.0, 128
      %343 = vxpose.xlu0.b32.cont [9/16] 0.0, 128
      %344 = vxpose.xlu0.b32.cont [10/16] 0.0, 128
      %345 = vxpose.xlu0.b32.cont [11/16] 0.0, 128
      %346 = vxpose.xlu0.b32.cont [12/16] 0.0, 128
      %347 = vxpose.xlu0.b32.cont [13/16] 0.0, 128
      %348 = vxpose.xlu0.b32.cont [14/16] 0.0, 128
      %349 = vxpose.xlu0.b32.cont [15/16] 0.0, 128
      %350 = vxpose.xlu0.b32.end [16/16] 0.0, 128
      %v351 = vpop.trf.xlu0
      %v352 = vpop.trf.xlu0
      %v353 = vpop.trf.xlu0
      %v354 = vpop.trf.xlu0
      %v355 = vpop.trf.xlu0
      %v356 = vpop.trf.xlu0
      %v357 = vpop.trf.xlu0
      %v358 = vpop.trf.xlu0
      %v359 = vpop.trf.xlu0
      %v360 = vpop.trf.xlu0
      %v361 = vpop.trf.xlu0
      %v362 = vpop.trf.xlu0
      %v363 = vpop.trf.xlu0
      %v364 = vpop.trf.xlu0
      %v365 = vpop.trf.xlu0
      %v366 = vpop.trf.xlu0
      %vm367 = vcmask 7168
      %v369 = vsel %vm367, %v351, 0
      %v372 = vsel %vm367, %v352, 0
      %v375 = vsel %vm367, %v353, 0
      %v378 = vsel %vm367, %v354, 0
      %vm380 = vcmask 1040384
      %v382 = vsel %vm380, %v303, 0
      %384 = vmatpush.msra.mxu0 0.0
      %385 = vmatpush.msra.mxu0 0.0
      %386 = vmatpush.msra.mxu0 0.0
      %387 = vmatpush.msra.mxu0 0.0
      %388 = vmatpush.msra.mxu0 0.0
      %389 = vmatpush.msra.mxu0 0.0
      %390 = vmatpush.msra.mxu0 0.0
      %391 = vmatpush.msra.mxu0 0.0
      %392 = vmatpush.msra.mxu0 0.0
      %393 = vmatpush.msra.mxu0 0.0
      %394 = vmatpush.msra.mxu0 0.0
      %395 = vmatpush.msra.mxu0 0.0
      %396 = vmatpush.msra.mxu0 0.0
      %397 = vmatpush.msra.mxu0 0.0
      %398 = vmatpush.msra.mxu0 0.0
      %399 = vmatpush.msra.mxu0 %v382
      %400 = vmatmul.f32.gmra.mxu0 %v369
      %v401 = vpop.f32.mrf.mxu0
      %v402 = vadd.f32 0.0, %v401
      %403 = vmatmul.f32.gmra.mxu0 %v372
      %v404 = vpop.f32.mrf.mxu0
      %v405 = vadd.f32 0.0, %v404
      %406 = vmatmul.f32.gmra.mxu0 %v375
      %v407 = vpop.f32.mrf.mxu0
      %v408 = vadd.f32 0.0, %v407
      %409 = vmatmul.f32.gmra.mxu0 %v378
      %v410 = vpop.f32.mrf.mxu0
      %v411 = vadd.f32 0.0, %v410
      %412 = vdwg.mxu0
      %v413 = vld [vmem:[#allocation2] sm:$0xff]
      %v414 = vld [vmem:[#allocation2 + $0x8] sm:$0xff]
      %v415 = vld [vmem:[#allocation2 + $0x10] sm:$0xff]
      %v416 = vld [vmem:[#allocation2 + $0x18] sm:$0xff]
      %v417 = vmul.f32 %v402, 0.125
      %v418 = vmul.f32 %v405, 0.125
      %v419 = vmul.f32 %v408, 0.125
      %v420 = vmul.f32 %v411, 0.125
      %v421 = vsub.f32 %v413, %v417
      %v422 = vsub.f32 %v414, %v418
      %v423 = vsub.f32 %v415, %v419
      %v424 = vsub.f32 %v416, %v420
      %v425 = vmul.f32 %v421, %v421
      %v426 = vmul.f32 %v422, %v422
      %v427 = vmul.f32 %v423, %v423
      %v428 = vmul.f32 %v424, %v424
      %v429 = vsel %vm143, %v425, 0.0
      %v430 = vsel %vm143, %v426, 0.0
      %v431 = vadd.f32 %v429, %v430
      %v432 = vsel %vm143, %v427, 0.0
      %v433 = vadd.f32 %v431, %v432
      %v434 = vsel %vm143, %v428, 0.0
      %v435 = vadd.f32 %v433, %v434
      %436 = vadd.xlane.f32.xlu0 %v435
      %v437 = vpop.xlane.xlu0 %436
      %v438 = vrot.slane %v437, 4
      %v439 = vadd.f32 %v437, %v438
      %v440 = vrot.slane %v439, 2
      %v441 = vadd.f32 %v439, %v440
      %v442 = vrot.slane %v441, 1
      %v443 = vadd.f32 %v441, %v442
      %s444 = vtos %v443
      %v445 = vmul.f32 %v307, %v307
      %v446 = vsel %vm242, %v445, 0.0
      %447 = vadd.xlane.f32.xlu0 %v446
      %v448 = vpop.xlane.xlu0 %447
      %v449 = vrot.slane %v448, 4
      %v450 = vadd.f32 %v448, %v449
      %v451 = vrot.slane %v450, 2
      %v452 = vadd.f32 %v450, %v451
      %v453 = vrot.slane %v452, 1
      %v454 = vadd.f32 %v452, %v453
      %s455 = vtos %v454
      %s456 = ssub.f32 %s444, %s455
      %s457 = smul.f32 %s456, 0.0006377551
      %v458 = vld [vmem:[#allocation5] sm:$0x1]
      %v459 = vld [vmem:[#allocation7] sm:$0x1]
      %v460 = vmul.f32 %v458, %v458
      %v461 = vmul.f32 %v460, 0.125
      %v462 = vsub.f32 %v459, %v461
      %v463 = vmul.f32 %v462, 0.14285715
      %v464 = vadd.f32 %v463, 0.0001
      %v465 = vrsqrt.pop %v464
      %v466 = vmul.f32 %v465, %v464
      %v467 = vmul.f32 %v466, %v465
      %v468 = vmul.f32 0.5, %v467
      %v469 = vsub.f32 1.5, %v468
      %v470 = vmul.f32 %v465, %v469
      %v471 = vmul.f32 %v464, %v470
      %vm472 = vcmp.eq.f32.partialorder %v464, inf
      %v473 = vsel %vm472, %v464, %v471
      %vm474 = vcmp.eq.f32.partialorder %v464, 0.0
      %v475 = vand.u32 %v464, 2147483648
      %v476 = vsel %vm474, %v475, %v473
      %v477 = vsub.f32 1.0, %v476
      %v478 = vmax.f32 %v477, 0.0
      %v479 = vsel %vm242, %v478, 0.0
      %480 = vadd.xlane.f32.xlu0 %v479
      %v481 = vpop.xlane.xlu0 %480
      %v482 = vrot.slane %v481, 4
      %v483 = vadd.f32 %v481, %v482
      %v484 = vrot.slane %v483, 2
      %v485 = vadd.f32 %v483, %v484
      %v486 = vrot.slane %v485, 1
      %v487 = vadd.f32 %v485, %v486
      %s488 = vtos %v487
      %s489 = smul.f32 %s488, 0.03125
      %490 = vxpose.xlu0.b32.start [1/16] %v458, 128
      %491 = vxpose.xlu0.b32.cont [2/16] 0.0, 128
      %492 = vxpose.xlu0.b32.cont [3/16] 0.0, 128
      %493 = vxpose.xlu0.b32.cont [4/16] 0.0, 128
      %494 = vxpose.xlu0.b32.cont [5/16] 0.0, 128
      %495 = vxpose.xlu0.b32.cont [6/16] 0.0, 128
      %496 = vxpose.xlu0.b32.cont [7/16] 0.0, 128
      %497 = vxpose.xlu0.b32.cont [8/16] 0.0, 128
      %498 = vxpose.xlu0.b32.cont [9/16] 0.0, 128
      %499 = vxpose.xlu0.b32.cont [10/16] 0.0, 128
      %500 = vxpose.xlu0.b32.cont [11/16] 0.0, 128
      %501 = vxpose.xlu0.b32.cont [12/16] 0.0, 128
      %502 = vxpose.xlu0.b32.cont [13/16] 0.0, 128
      %503 = vxpose.xlu0.b32.cont [14/16] 0.0, 128
      %504 = vxpose.xlu0.b32.cont [15/16] 0.0, 128
      %505 = vxpose.xlu0.b32.end [16/16] 0.0, 128
      %v506 = vpop.trf.xlu0
      %v507 = vpop.trf.xlu0
      %v508 = vpop.trf.xlu0
      %v509 = vpop.trf.xlu0
      %v510 = vpop.trf.xlu0
      %v511 = vpop.trf.xlu0
      %v512 = vpop.trf.xlu0
      %v513 = vpop.trf.xlu0
      %v514 = vpop.trf.xlu0
      %v515 = vpop.trf.xlu0
      %v516 = vpop.trf.xlu0
      %v517 = vpop.trf.xlu0
      %v518 = vpop.trf.xlu0
      %v519 = vpop.trf.xlu0
      %v520 = vpop.trf.xlu0
      %v521 = vpop.trf.xlu0
      %v523 = vsel %vm367, %v506, 0
      %v526 = vsel %vm367, %v507, 0
      %v529 = vsel %vm367, %v508, 0
      %v532 = vsel %vm367, %v509, 0
      %v535 = vsel %vm380, %v458, 0
      %537 = vmatpush.msra.mxu0 0.0
      %538 = vmatpush.msra.mxu0 0.0
      %539 = vmatpush.msra.mxu0 0.0
      %540 = vmatpush.msra.mxu0 0.0
      %541 = vmatpush.msra.mxu0 0.0
      %542 = vmatpush.msra.mxu0 0.0
      %543 = vmatpush.msra.mxu0 0.0
      %544 = vmatpush.msra.mxu0 0.0
      %545 = vmatpush.msra.mxu0 0.0
      %546 = vmatpush.msra.mxu0 0.0
      %547 = vmatpush.msra.mxu0 0.0
      %548 = vmatpush.msra.mxu0 0.0
      %549 = vmatpush.msra.mxu0 0.0
      %550 = vmatpush.msra.mxu0 0.0
      %551 = vmatpush.msra.mxu0 0.0
      %552 = vmatpush.msra.mxu0 %v535
      %553 = vmatmul.f32.gmra.mxu0 %v523
      %v554 = vpop.f32.mrf.mxu0
      %v555 = vadd.f32 0.0, %v554
      %556 = vmatmul.f32.gmra.mxu0 %v526
      %v557 = vpop.f32.mrf.mxu0
      %v558 = vadd.f32 0.0, %v557
      %559 = vmatmul.f32.gmra.mxu0 %v529
      %v560 = vpop.f32.mrf.mxu0
      %v561 = vadd.f32 0.0, %v560
      %562 = vmatmul.f32.gmra.mxu0 %v532
      %v563 = vpop.f32.mrf.mxu0
      %v564 = vadd.f32 0.0, %v563
      %565 = vdwg.mxu0
      %v566 = vld [vmem:[#allocation3] sm:$0xff]
      %v567 = vld [vmem:[#allocation3 + $0x8] sm:$0xff]
      %v568 = vld [vmem:[#allocation3 + $0x10] sm:$0xff]
      %v569 = vld [vmem:[#allocation3 + $0x18] sm:$0xff]
      %v570 = vmul.f32 %v555, 0.125
      %v571 = vmul.f32 %v558, 0.125
      %v572 = vmul.f32 %v561, 0.125
      %v573 = vmul.f32 %v564, 0.125
      %v574 = vsub.f32 %v566, %v570
      %v575 = vsub.f32 %v567, %v571
      %v576 = vsub.f32 %v568, %v572
      %v577 = vsub.f32 %v569, %v573
      %v578 = vmul.f32 %v574, %v574
      %v579 = vmul.f32 %v575, %v575
      %v580 = vmul.f32 %v576, %v576
      %v581 = vmul.f32 %v577, %v577
      %v582 = vsel %vm143, %v578, 0.0
      %v583 = vsel %vm143, %v579, 0.0
      %v584 = vadd.f32 %v582, %v583
      %v585 = vsel %vm143, %v580, 0.0
      %v586 = vadd.f32 %v584, %v585
      %v587 = vsel %vm143, %v581, 0.0
      %v588 = vadd.f32 %v586, %v587
      %589 = vadd.xlane.f32.xlu0 %v588
      %v590 = vpop.xlane.xlu0 %589
      %v591 = vrot.slane %v590, 4
      %v592 = vadd.f32 %v590, %v591
      %v593 = vrot.slane %v592, 2
      %v594 = vadd.f32 %v592, %v593
      %v595 = vrot.slane %v594, 1
      %v596 = vadd.f32 %v594, %v595
      %s597 = vtos %v596
      %v598 = vmul.f32 %v462, %v462
      %v599 = vsel %vm242, %v598, 0.0
      %600 = vadd.xlane.f32.xlu0 %v599
      %v601 = vpop.xlane.xlu0 %600
      %v602 = vrot.slane %v601, 4
      %v603 = vadd.f32 %v601, %v602
      %v604 = vrot.slane %v603, 2
      %v605 = vadd.f32 %v603, %v604
      %v606 = vrot.slane %v605, 1
      %v607 = vadd.f32 %v605, %v606
      %s608 = vtos %v607
      %s609 = ssub.f32 %s597, %s608
      %s610 = smul.f32 %s609, 0.0006377551
      %s611 = smul.f32 %s302, 25.0
      %s612 = sadd.f32 %s334, %s489
      %s613 = smul.f32 %s612, 12.5
      %s614 = sadd.f32 %s611, %s613
      %s615 = sadd.f32 %s457, %s610
      %s616 = sadd.f32 %s614, %s615
      %s617 = scalar_lea.smem [#allocation14], 0
      %618 = sst [smem:[%s617]] %s616
    $region25: #{vicreg_loss.1} parent=1 // pred_fallthru
      _
    // Predicated region
    $region26: #{vicreg_loss.1} parent=1 // pred_check
      _
    $region27: #{vicreg_loss.1} parent=1 // pred_check_branch
      %620 = sbr.rel (0) target = $region29
    $region28: #{vicreg_loss.1} parent=1 // pred_region
      %622 = vsyncadd [#allocation11], 0
      %s624 = sshll.u32 %s2, 4
      %s625 = int_to_ptr.hbm [resolvable:$true] %s624
      %627 = dma.smem_to_hbm [#allocation14], 16, %s625, [#allocation11]
    $region29: #{vicreg_loss.1} parent=1 // pred_fallthru
      _
    // Predicated region
    $region30: #{vicreg_loss.1} parent=1 // pred_check
      _
    $region31: #{vicreg_loss.1} parent=1 // pred_check_branch
      %629 = sbr.rel (0) target = $region33
    $region32: #{vicreg_loss.1} parent=1 // pred_region
      %631 = dma.done [#allocation11], 16
    $region33: #{vicreg_loss.1} parent=1 // pred_fallthru
      _
    %632 = sfence
    %633 = vsyncpa [#allocation10], 1
    %634 = vsyncpa [#allocation13], 1
    %635 = vsyncpa [#allocation11], 1

</llo_original>
